<compile_context>
chip_gen: v6e
topology: v6e:2x2x1
jax: 0.10.0
libtpu: 0.0.40
codegen_flags: <defaults>
</compile_context>

<pallas_src>
import jax
import jax.numpy as jnp
from jax.experimental import pallas as pl
from jax.experimental.pallas import tpu as pltpu


def _round_up(x, m):
    return (x + m - 1) // m * m


def reward_fc_kernel(z_ref, w1_ref, b1_ref, w2_ref, b2_ref, w3_ref, b3_ref, o_ref):
    # z:  (tb, Z)   bf16     w1: (Z, 512)  bf16     b1: (1, 512) f32
    # w2: (512,256) bf16     b2: (1, 256)  f32
    # w3: (1, 256)  f32      b3: (1, 1)    f32      o:  (tb, 1)  f32
    z = z_ref[...]

    # Layer 1: bf16 MXU matmul, f32 accumulation, f32 bias + ReLU.
    h1 = jnp.dot(z, w1_ref[...], preferred_element_type=jnp.float32) + b1_ref[...]
    h1 = jnp.maximum(h1, 0.0)

    # Layer 2: cast activations to bf16 for the MXU, accumulate in f32.
    h2 = (jnp.dot(h1.astype(jnp.bfloat16), w2_ref[...],
                  preferred_element_type=jnp.float32) + b2_ref[...])
    h2 = jnp.maximum(h2, 0.0)

    # Layer 3 (256 -> 1): N=1 matmul wastes the MXU; do it as a VPU multiply
    # + cross-lane reduction (XLU) which runs in otherwise-idle slots.
    logit = jnp.sum(h2 * w3_ref[...], axis=-1, keepdims=True) + b3_ref[...]

    # Sigmoid with the reciprocal on the EUP.
    r = pl.reciprocal(1.0 + jnp.exp(-logit), approx=True)
    o_ref[...] = r.astype(o_ref.dtype)


def reward_fc(z, w1, b1, w2, b2, w3, b3, *, tb=256):
    B, Z = z.shape
    H1 = w1.shape[1]
    H2 = w2.shape[1]

    # Effective batch tile: MXU-friendly (default 256), but never larger than the
    # sublane-padded batch; always a multiple of 8 (sublane granularity).
    tb_eff = min(tb, _round_up(B, 8))
    tb_eff = _round_up(tb_eff, 8)
    Bp = _round_up(B, tb_eff)

    zp = z if Bp == B else jnp.pad(z, ((0, Bp - B), (0, 0)))

    # bf16 operands for the MXU; biases and the 256->1 row stay f32.
    z_bf = zp.astype(jnp.bfloat16)
    w1_bf = w1.astype(jnp.bfloat16)
    w2_bf = w2.astype(jnp.bfloat16)
    w3_row = w3.reshape(1, H2).astype(jnp.float32)
    b1_f = b1.reshape(1, H1).astype(jnp.float32)
    b2_f = b2.reshape(1, H2).astype(jnp.float32)
    b3_f = b3.reshape(1, 1).astype(jnp.float32)

    grid = (Bp // tb_eff,)

    out = pl.pallas_call(
        reward_fc_kernel,
        out_shape=jax.ShapeDtypeStruct((Bp, 1), jnp.float32),
        grid_spec=pltpu.PrefetchScalarGridSpec(
            num_scalar_prefetch=0,
            grid=grid,
            in_specs=[
                pl.BlockSpec((tb_eff, Z), lambda i: (i, 0)),   # z (tiled over batch)
                # Weights/biases: constant index_map -> resident across the grid.
                pl.BlockSpec((Z, H1), lambda i: (0, 0)),       # w1
                pl.BlockSpec((1, H1), lambda i: (0, 0)),       # b1
                pl.BlockSpec((H1, H2), lambda i: (0, 0)),      # w2
                pl.BlockSpec((1, H2), lambda i: (0, 0)),       # b2
                pl.BlockSpec((1, H2), lambda i: (0, 0)),       # w3 (as a row)
                pl.BlockSpec((1, 1), lambda i: (0, 0)),        # b3
            ],
            out_specs=pl.BlockSpec((tb_eff, 1), lambda i: (i, 0)),
        ),
        compiler_params=pltpu.CompilerParams(
            dimension_semantics=("parallel",),
        ),
    )(z_bf, w1_bf, b1_f, w2_bf, b2_f, w3_row, b3_f)

    return out[:B]


def init_params(key, z_dim=512):
    # Deterministic synthetic init (uniform ~ torch's default kaiming-uniform scale).
    k1, k2, k3, k4, k5, k6 = jax.random.split(key, 6)

    def lin(kw, kb, fan_in, fan_out):
        bound = 1.0 / (fan_in ** 0.5)
        # stored transposed: (in, out)
        w = jax.random.uniform(kw, (fan_in, fan_out), jnp.float32, -bound, bound)
        b = jax.random.uniform(kb, (1, fan_out), jnp.float32, -bound, bound)
        return w, b

    w1, b1 = lin(k1, k2, z_dim, 512)
    w2, b2 = lin(k3, k4, 512, 256)
    w3, b3 = lin(k5, k6, 256, 1)
    return w1, b1, w2, b2, w3, b3


def reward_fc_ref(z, w1, b1, w2, b2, w3, b3):
    h1 = jnp.maximum(z @ w1 + b1, 0.0)
    h2 = jnp.maximum(h1 @ w2 + b2, 0.0)
    return jax.nn.sigmoid(h2 @ w3 + b3)


if __name__ == "__main__":
    z_dim = 512
    batch = 8

    key = jax.random.PRNGKey(0)
    kz, kp = jax.random.split(key)
    z = jax.random.normal(kz, (batch, z_dim), jnp.float32)
    params = init_params(kp, z_dim=z_dim)

    out = reward_fc(z, *params)          # small batch: tile clamps to 8, grid=(1,)
    out = jax.block_until_ready(out)
    ref = reward_fc_ref(z, *params)
    assert out.shape == (batch, 1)
    # bf16 MXU operands -> loosened tolerance vs the f32 reference.
    assert jnp.allclose(out, ref, atol=2e-2, rtol=2e-2)

    # Exercise the padded / tiled path (B not a multiple of the tile).
    z2 = jax.random.normal(jax.random.PRNGKey(1), (20, z_dim), jnp.float32)
    out2 = jax.block_until_ready(reward_fc(z2, *params))
    ref2 = reward_fc_ref(z2, *params)
    assert out2.shape == (20, 1)
    assert jnp.allclose(out2, ref2, atol=2e-2, rtol=2e-2)

    print("KERNEL_OK")
</pallas_src>

<mosaic_0001>
module attributes {stable_mosaic.version = 11 : i64} {
  func.func @reward_fc_kernel(%arg0: i32, %arg1: memref<8x512xbf16, #tpu.memory_space<vmem>>, %arg2: memref<512x512xbf16, #tpu.memory_space<vmem>>, %arg3: memref<1x512xf32, #tpu.memory_space<vmem>>, %arg4: memref<512x256xbf16, #tpu.memory_space<vmem>>, %arg5: memref<1x256xf32, #tpu.memory_space<vmem>>, %arg6: memref<1x256xf32, #tpu.memory_space<vmem>>, %arg7: memref<1x1xf32, #tpu.memory_space<vmem>>, %arg8: memref<8x1xf32, #tpu.memory_space<vmem>>) attributes {dimension_semantics = [#tpu.dimension_semantics<parallel>], iteration_bounds = array<i64: 1>, scalar_prefetch = 0 : i64, scratch_operands = 0 : i64, tpu.core_type = #tpu.core_type<tc>, window_params = [{transform_indices = @transform_0, window_bounds = array<i64: 8, 512>}, {pipeline_mode = #tpu.pipeline_mode<synchronous>, transform_indices = @transform_1, window_bounds = array<i64: 512, 512>}, {pipeline_mode = #tpu.pipeline_mode<synchronous>, transform_indices = @transform_2, window_bounds = array<i64: 1, 512>}, {pipeline_mode = #tpu.pipeline_mode<synchronous>, transform_indices = @transform_3, window_bounds = array<i64: 512, 256>}, {pipeline_mode = #tpu.pipeline_mode<synchronous>, transform_indices = @transform_4, window_bounds = array<i64: 1, 256>}, {pipeline_mode = #tpu.pipeline_mode<synchronous>, transform_indices = @transform_5, window_bounds = array<i64: 1, 256>}, {pipeline_mode = #tpu.pipeline_mode<synchronous>, transform_indices = @transform_6, window_bounds = array<i64: 1, 1>}, {transform_indices = @transform_7, window_bounds = array<i64: 8, 1>}]} {
    %c0 = arith.constant 0 : index
    %c0_0 = arith.constant 0 : index
    %0 = vector.load %arg1[%c0, %c0_0] : memref<8x512xbf16, #tpu.memory_space<vmem>>, vector<8x512xbf16>
    %c0_1 = arith.constant 0 : index
    %c0_2 = arith.constant 0 : index
    %1 = vector.load %arg2[%c0_1, %c0_2] : memref<512x512xbf16, #tpu.memory_space<vmem>>, vector<512x512xbf16>
    %cst = arith.constant dense<0.000000e+00> : vector<8x512xf32>
    %2 = tpu.matmul %0, %1, %cst {dimension_numbers = #tpu.dot_dimension_numbers<[1], [0], [0], [1], [0, 0, 1, 1], [], []>} : vector<8x512xbf16>, vector<512x512xbf16>, vector<8x512xf32> -> vector<8x512xf32>
    %c0_3 = arith.constant 0 : index
    %c0_4 = arith.constant 0 : index
    %3 = vector.load %arg3[%c0_3, %c0_4] : memref<1x512xf32, #tpu.memory_space<vmem>>, vector<1x512xf32>
    %4 = vector.broadcast %3 : vector<1x512xf32> to vector<8x512xf32>
    %5 = arith.addf %2, %4 : vector<8x512xf32>
    %cst_5 = arith.constant 0.000000e+00 : f32
    %6 = vector.broadcast %cst_5 : f32 to vector<8x512xf32>
    %7 = arith.maximumf %5, %6 : vector<8x512xf32>
    %8 = arith.truncf %7 : vector<8x512xf32> to vector<8x512xbf16>
    %c0_6 = arith.constant 0 : index
    %c0_7 = arith.constant 0 : index
    %9 = vector.load %arg4[%c0_6, %c0_7] : memref<512x256xbf16, #tpu.memory_space<vmem>>, vector<512x256xbf16>
    %cst_8 = arith.constant dense<0.000000e+00> : vector<8x256xf32>
    %10 = tpu.matmul %8, %9, %cst_8 {dimension_numbers = #tpu.dot_dimension_numbers<[1], [0], [0], [1], [0, 0, 1, 1], [], []>} : vector<8x512xbf16>, vector<512x256xbf16>, vector<8x256xf32> -> vector<8x256xf32>
    %c0_9 = arith.constant 0 : index
    %c0_10 = arith.constant 0 : index
    %11 = vector.load %arg5[%c0_9, %c0_10] : memref<1x256xf32, #tpu.memory_space<vmem>>, vector<1x256xf32>
    %12 = vector.broadcast %11 : vector<1x256xf32> to vector<8x256xf32>
    %13 = arith.addf %10, %12 : vector<8x256xf32>
    %cst_11 = arith.constant 0.000000e+00 : f32
    %14 = vector.broadcast %cst_11 : f32 to vector<8x256xf32>
    %15 = arith.maximumf %13, %14 : vector<8x256xf32>
    %c0_12 = arith.constant 0 : index
    %c0_13 = arith.constant 0 : index
    %16 = vector.load %arg6[%c0_12, %c0_13] : memref<1x256xf32, #tpu.memory_space<vmem>>, vector<1x256xf32>
    %17 = vector.broadcast %16 : vector<1x256xf32> to vector<8x256xf32>
    %18 = arith.mulf %15, %17 : vector<8x256xf32>
    %cst_14 = arith.constant dense<0.000000e+00> : vector<8xf32>
    %19 = vector.multi_reduction <add>, %18, %cst_14 [1] : vector<8x256xf32> to vector<8xf32>
    %20 = vector.shape_cast %19 : vector<8xf32> to vector<8x1xf32>
    %c0_15 = arith.constant 0 : index
    %c0_16 = arith.constant 0 : index
    %21 = vector.load %arg7[%c0_15, %c0_16] : memref<1x1xf32, #tpu.memory_space<vmem>>, vector<1x1xf32>
    %22 = vector.broadcast %21 : vector<1x1xf32> to vector<8x1xf32>
    %23 = arith.addf %20, %22 : vector<8x1xf32>
    %cst_17 = arith.constant 0.000000e+00 : f32
    %24 = vector.broadcast %cst_17 : f32 to vector<8x1xf32>
    %25 = arith.subf %24, %23 : vector<8x1xf32>
    %26 = math.exp %25 : vector<8x1xf32>
    %cst_18 = arith.constant 1.000000e+00 : f32
    %27 = vector.broadcast %cst_18 : f32 to vector<8x1xf32>
    %28 = arith.addf %27, %26 : vector<8x1xf32>
    %29 = tpu.reciprocal %28 {approx = true} : vector<8x1xf32> -> vector<8x1xf32>
    %c0_19 = arith.constant 0 : index
    %c0_20 = arith.constant 0 : index
    %30 = vector.load %arg8[%c0_19, %c0_20] : memref<8x1xf32, #tpu.memory_space<vmem>>, vector<8x1xf32>
    tpu.vector_store %arg8[%c0_19, %c0_20], %29 {strides = array<i32>} : memref<8x1xf32, #tpu.memory_space<vmem>>, vector<8x1xf32>,
    return
  }
  func.func @transform_0(%arg0: i32) -> (i32, i32) {
    %c0_i32 = arith.constant 0 : i32
    %c0_i32_0 = arith.constant 0 : i32
    return %arg0, %c0_i32 : i32, i32
  }
  func.func @transform_1(%arg0: i32) -> (i32, i32) {
    %c0_i32 = arith.constant 0 : i32
    %c0_i32_0 = arith.constant 0 : i32
    %c0_i32_1 = arith.constant 0 : i32
    return %c0_i32, %c0_i32_0 : i32, i32
  }
  func.func @transform_2(%arg0: i32) -> (i32, i32) {
    %c0_i32 = arith.constant 0 : i32
    %c0_i32_0 = arith.constant 0 : i32
    %c0_i32_1 = arith.constant 0 : i32
    return %c0_i32, %c0_i32_0 : i32, i32
  }
  func.func @transform_3(%arg0: i32) -> (i32, i32) {
    %c0_i32 = arith.constant 0 : i32
    %c0_i32_0 = arith.constant 0 : i32
    %c0_i32_1 = arith.constant 0 : i32
    return %c0_i32, %c0_i32_0 : i32, i32
  }
  func.func @transform_4(%arg0: i32) -> (i32, i32) {
    %c0_i32 = arith.constant 0 : i32
    %c0_i32_0 = arith.constant 0 : i32
    %c0_i32_1 = arith.constant 0 : i32
    return %c0_i32, %c0_i32_0 : i32, i32
  }
  func.func @transform_5(%arg0: i32) -> (i32, i32) {
    %c0_i32 = arith.constant 0 : i32
    %c0_i32_0 = arith.constant 0 : i32
    %c0_i32_1 = arith.constant 0 : i32
    return %c0_i32, %c0_i32_0 : i32, i32
  }
  func.func @transform_6(%arg0: i32) -> (i32, i32) {
    %c0_i32 = arith.constant 0 : i32
    %c0_i32_0 = arith.constant 0 : i32
    %c0_i32_1 = arith.constant 0 : i32
    return %c0_i32, %c0_i32_0 : i32, i32
  }
  func.func @transform_7(%arg0: i32) -> (i32, i32) {
    %c0_i32 = arith.constant 0 : i32
    %c0_i32_0 = arith.constant 0 : i32
    return %arg0, %c0_i32 : i32, i32
  }
}

</mosaic_0001>

<llo_original>
// kernel: tpu_custom_call.1
$region0: #{tpu_custom_call.1}
  #allocation0 [shape = 'u32[]', space=smem, size = 0x4, offset = 0x4, fixed_abs, tag = 'smem constant byte address 0x4 - core index']
  #allocation1 [shape = 'u32[144,128]{1,0:T(1,128)}', space=vmem, size = 0x12000, scoped, tag = 'internal scratch']
  #allocation2 [shape = 'f32[1,1]{1,0:T(1,128)S(1)}', space=vmem, size = 0x200, scoped, tag = 'scoped memory for tpu_custom_call.1']
  %s0 = inlined_call_operand.hbm [shape: bf16[8,512], index: 0, kind: input, shape index: {}]
  %s1 = inlined_call_operand.hbm [shape: bf16[512,512], index: 1, kind: input, shape index: {}]
  %s2 = inlined_call_operand.vmem [shape: f32[1,512], index: 2, kind: input, shape index: {}]
  %s3 = inlined_call_operand.hbm [shape: bf16[512,256], index: 3, kind: input, shape index: {}]
  %s4 = inlined_call_operand.vmem [shape: f32[1,256], index: 4, kind: input, shape index: {}]
  %s5 = inlined_call_operand.vmem [shape: f32[1,256], index: 5, kind: input, shape index: {}]
  %s6 = inlined_call_operand.<no memory space> [shape: f32[1,1], index: 6, kind: input, shape index: {}]
  %s7 = inlined_call_operand.vmem [shape: f32[8,1], index: 7, kind: output, shape index: {}]
  %s8 = sld [smem:[#allocation0]]
  $region50: #{tpu_custom_call.1} parent=0
    _
  %s10 = ssub.s32 1, %s8
  %s11 = scalar_select 0, %s10, %s8
  %v12 = vstv %s6
  %13 = vst [vmem:[#allocation2] sm:$0x1] %v12
  $region1: #{tpu_custom_call.1} parent=0
    #allocation3 [shape = 'u8[8192]{0}', space=vmem, size = 0x2000, scoped, tag = 'input window, operand 0, single buffered']
    #allocation4 [shape = 's32[1]{0}', space=sflag, size = 0x4, scoped, tag = 'scoped memory for tpu_custom_call.1']
    #allocation5 [shape = 'u8[524288]{0}', space=vmem, size = 0x80000, scoped, tag = 'input window, operand 1, single buffered']
    #allocation6 [shape = 's32[1]{0}', space=sflag, size = 0x4, scoped, tag = 'scoped memory for tpu_custom_call.1']
    #allocation7 [shape = 'u8[262144]{0}', space=vmem, size = 0x40000, scoped, tag = 'input window, operand 3, single buffered']
    %14 = vsyncpa [#allocation4], 0
    %15 = vsyncpa [#allocation6], 0
    // Predicated region
    $region2: #{tpu_custom_call.1} parent=1 // pred_check
      _
    $region3: #{tpu_custom_call.1} parent=1 // pred_check_branch
      %17 = sbr.rel (0) target = $region5
    $region4: #{tpu_custom_call.1} parent=1 // pred_region
      %s19 = ssub.s32 256, 256
      %20 = vsyncadd [#allocation4], %s19
      %s22 = sshll.u32 [#allocation3], 4
      %s23 = int_to_ptr.vmem [resolvable:$true] %s22
      %25 = dma.hbm_to_vmem [thread:$0]  %s0, 256, %s23, [#allocation4]
    $region5: #{tpu_custom_call.1} parent=1 // pred_fallthru
      _
    // Predicated region
    $region6: #{tpu_custom_call.1} parent=1 // pred_check
      _
    $region7: #{tpu_custom_call.1} parent=1 // pred_check_branch
      %27 = sbr.rel (0) target = $region9
    $region8: #{tpu_custom_call.1} parent=1 // pred_region
      %s29 = ssub.s32 16384, 16384
      %30 = vsyncadd [#allocation6], %s29
      %s31 = sshll.u32 [#allocation5], 4
      %s32 = int_to_ptr.vmem [resolvable:$true] %s31
      %37 = dma.hbm_to_vmem [thread:$0]  %s1, 16384, %s32, [#allocation6], 256, 256, 16
    $region9: #{tpu_custom_call.1} parent=1 // pred_fallthru
      _
    // Predicated region
    $region10: #{tpu_custom_call.1} parent=1 // pred_check
      _
    $region11: #{tpu_custom_call.1} parent=1 // pred_check_branch
      %39 = sbr.rel (0) target = $region13
    $region12: #{tpu_custom_call.1} parent=1 // pred_region
      _
    $region13: #{tpu_custom_call.1} parent=1 // pred_fallthru
      _
    // Predicated region
    $region14: #{tpu_custom_call.1} parent=1 // pred_check
      _
    $region15: #{tpu_custom_call.1} parent=1 // pred_check_branch
      %41 = sbr.rel (0) target = $region17
    $region16: #{tpu_custom_call.1} parent=1 // pred_region
      %s43 = ssub.s32 8192, 8192
      %44 = vsyncadd [#allocation6], %s43
      %s45 = sshll.u32 [#allocation7], 4
      %s46 = int_to_ptr.vmem [resolvable:$true] %s45
      %51 = dma.hbm_to_vmem [thread:$0]  %s3, 8192, %s46, [#allocation6], 128, 128, 8
    $region17: #{tpu_custom_call.1} parent=1 // pred_fallthru
      _
    // Predicated region
    $region18: #{tpu_custom_call.1} parent=1 // pred_check
      _
    $region19: #{tpu_custom_call.1} parent=1 // pred_check_branch
      %53 = sbr.rel (0) target = $region21
    $region20: #{tpu_custom_call.1} parent=1 // pred_region
      _
    $region21: #{tpu_custom_call.1} parent=1 // pred_fallthru
      _
    // Predicated region
    $region22: #{tpu_custom_call.1} parent=1 // pred_check
      _
    $region23: #{tpu_custom_call.1} parent=1 // pred_check_branch
      %55 = sbr.rel (0) target = $region25
    $region24: #{tpu_custom_call.1} parent=1 // pred_region
      _
    $region25: #{tpu_custom_call.1} parent=1 // pred_fallthru
      _
    // Predicated region
    $region26: #{tpu_custom_call.1} parent=1 // pred_check
      _
    $region27: #{tpu_custom_call.1} parent=1 // pred_check_branch
      %57 = sbr.rel (0) target = $region29
    $region28: #{tpu_custom_call.1} parent=1 // pred_region
      _
    $region29: #{tpu_custom_call.1} parent=1 // pred_fallthru
      _
    // Predicated region
    $region30: #{tpu_custom_call.1} parent=1 // pred_check
      _
    $region31: #{tpu_custom_call.1} parent=1 // pred_check_branch
      %59 = sbr.rel (0) target = $region33
    $region32: #{tpu_custom_call.1} parent=1 // pred_region
      %60 = dma.done [#allocation4], 256
    $region33: #{tpu_custom_call.1} parent=1 // pred_fallthru
      _
    // Predicated region
    $region34: #{tpu_custom_call.1} parent=1 // pred_check
      _
    $region35: #{tpu_custom_call.1} parent=1 // pred_check_branch
      %62 = sbr.rel (0) target = $region37
    $region36: #{tpu_custom_call.1} parent=1 // pred_region
      %63 = dma.done [#allocation6], 16384
    $region37: #{tpu_custom_call.1} parent=1 // pred_fallthru
      _
    // Predicated region
    $region38: #{tpu_custom_call.1} parent=1 // pred_check
      _
    $region39: #{tpu_custom_call.1} parent=1 // pred_check_branch
      %65 = sbr.rel (0) target = $region41
    $region40: #{tpu_custom_call.1} parent=1 // pred_region
      %66 = dma.done [#allocation6], 8192
    $region41: #{tpu_custom_call.1} parent=1 // pred_fallthru
      _
    %v67 = vld [vmem:[#allocation3] sm:$0xff]
    %v68 = vld [vmem:[#allocation3 + $0x8] sm:$0xff]
    %v69 = vld [vmem:[#allocation5] sm:$0xff]
    %v70 = vld [vmem:[#allocation5 + $0x8] sm:$0xff]
    %v71 = vld [vmem:[#allocation5 + $0x10] sm:$0xff]
    %v72 = vld [vmem:[#allocation5 + $0x18] sm:$0xff]
    %v73 = vld [vmem:[#allocation5 + $0x20] sm:$0xff]
    %v74 = vld [vmem:[#allocation5 + $0x28] sm:$0xff]
    %v75 = vld [vmem:[#allocation5 + $0x30] sm:$0xff]
    %v76 = vld [vmem:[#allocation5 + $0x38] sm:$0xff]
    %v77 = vld [vmem:[#allocation5 + $0x40] sm:$0xff]
    %v78 = vld [vmem:[#allocation5 + $0x48] sm:$0xff]
    %v79 = vld [vmem:[#allocation5 + $0x50] sm:$0xff]
    %v80 = vld [vmem:[#allocation5 + $0x58] sm:$0xff]
    %v81 = vld [vmem:[#allocation5 + $0x60] sm:$0xff]
    %v82 = vld [vmem:[#allocation5 + $0x68] sm:$0xff]
    %v83 = vld [vmem:[#allocation5 + $0x70] sm:$0xff]
    %v84 = vld [vmem:[#allocation5 + $0x78] sm:$0xff]
    %v85 = vld [vmem:[#allocation5 + $0x80] sm:$0xff]
    %v86 = vld [vmem:[#allocation5 + $0x88] sm:$0xff]
    %v87 = vld [vmem:[#allocation5 + $0x90] sm:$0xff]
    %v88 = vld [vmem:[#allocation5 + $0x98] sm:$0xff]
    %v89 = vld [vmem:[#allocation5 + $0xa0] sm:$0xff]
    %v90 = vld [vmem:[#allocation5 + $0xa8] sm:$0xff]
    %v91 = vld [vmem:[#allocation5 + $0xb0] sm:$0xff]
    %v92 = vld [vmem:[#allocation5 + $0xb8] sm:$0xff]
    %v93 = vld [vmem:[#allocation5 + $0xc0] sm:$0xff]
    %v94 = vld [vmem:[#allocation5 + $0xc8] sm:$0xff]
    %v95 = vld [vmem:[#allocation5 + $0xd0] sm:$0xff]
    %v96 = vld [vmem:[#allocation5 + $0xd8] sm:$0xff]
    %v97 = vld [vmem:[#allocation5 + $0xe0] sm:$0xff]
    %v98 = vld [vmem:[#allocation5 + $0xe8] sm:$0xff]
    %v99 = vld [vmem:[#allocation5 + $0xf0] sm:$0xff]
    %v100 = vld [vmem:[#allocation5 + $0xf8] sm:$0xff]
    %v101 = vld [vmem:[#allocation5 + $0x100] sm:$0xff]
    %v102 = vld [vmem:[#allocation5 + $0x108] sm:$0xff]
    %v103 = vld [vmem:[#allocation5 + $0x110] sm:$0xff]
    %v104 = vld [vmem:[#allocation5 + $0x118] sm:$0xff]
    %v105 = vld [vmem:[#allocation5 + $0x120] sm:$0xff]
    %v106 = vld [vmem:[#allocation5 + $0x128] sm:$0xff]
    %v107 = vld [vmem:[#allocation5 + $0x130] sm:$0xff]
    %v108 = vld [vmem:[#allocation5 + $0x138] sm:$0xff]
    %v109 = vld [vmem:[#allocation5 + $0x140] sm:$0xff]
    %v110 = vld [vmem:[#allocation5 + $0x148] sm:$0xff]
    %v111 = vld [vmem:[#allocation5 + $0x150] sm:$0xff]
    %v112 = vld [vmem:[#allocation5 + $0x158] sm:$0xff]
    %v113 = vld [vmem:[#allocation5 + $0x160] sm:$0xff]
    %v114 = vld [vmem:[#allocation5 + $0x168] sm:$0xff]
    %v115 = vld [vmem:[#allocation5 + $0x170] sm:$0xff]
    %v116 = vld [vmem:[#allocation5 + $0x178] sm:$0xff]
    %v117 = vld [vmem:[#allocation5 + $0x180] sm:$0xff]
    %v118 = vld [vmem:[#allocation5 + $0x188] sm:$0xff]
    %v119 = vld [vmem:[#allocation5 + $0x190] sm:$0xff]
    %v120 = vld [vmem:[#allocation5 + $0x198] sm:$0xff]
    %v121 = vld [vmem:[#allocation5 + $0x1a0] sm:$0xff]
    %v122 = vld [vmem:[#allocation5 + $0x1a8] sm:$0xff]
    %v123 = vld [vmem:[#allocation5 + $0x1b0] sm:$0xff]
    %v124 = vld [vmem:[#allocation5 + $0x1b8] sm:$0xff]
    %v125 = vld [vmem:[#allocation5 + $0x1c0] sm:$0xff]
    %v126 = vld [vmem:[#allocation5 + $0x1c8] sm:$0xff]
    %v127 = vld [vmem:[#allocation5 + $0x1d0] sm:$0xff]
    %v128 = vld [vmem:[#allocation5 + $0x1d8] sm:$0xff]
    %v129 = vld [vmem:[#allocation5 + $0x1e0] sm:$0xff]
    %v130 = vld [vmem:[#allocation5 + $0x1e8] sm:$0xff]
    %v131 = vld [vmem:[#allocation5 + $0x1f0] sm:$0xff]
    %v132 = vld [vmem:[#allocation5 + $0x1f8] sm:$0xff]
    %v133 = vld [vmem:[#allocation5 + $0x200] sm:$0xff]
    %v134 = vld [vmem:[#allocation5 + $0x208] sm:$0xff]
    %v135 = vld [vmem:[#allocation5 + $0x210] sm:$0xff]
    %v136 = vld [vmem:[#allocation5 + $0x218] sm:$0xff]
    %v137 = vld [vmem:[#allocation5 + $0x220] sm:$0xff]
    %v138 = vld [vmem:[#allocation5 + $0x228] sm:$0xff]
    %v139 = vld [vmem:[#allocation5 + $0x230] sm:$0xff]
    %v140 = vld [vmem:[#allocation5 + $0x238] sm:$0xff]
    %v141 = vld [vmem:[#allocation5 + $0x240] sm:$0xff]
    %v142 = vld [vmem:[#allocation5 + $0x248] sm:$0xff]
    %v143 = vld [vmem:[#allocation5 + $0x250] sm:$0xff]
    %v144 = vld [vmem:[#allocation5 + $0x258] sm:$0xff]
    %v145 = vld [vmem:[#allocation5 + $0x260] sm:$0xff]
    %v146 = vld [vmem:[#allocation5 + $0x268] sm:$0xff]
    %v147 = vld [vmem:[#allocation5 + $0x270] sm:$0xff]
    %v148 = vld [vmem:[#allocation5 + $0x278] sm:$0xff]
    %v149 = vld [vmem:[#allocation5 + $0x280] sm:$0xff]
    %v150 = vld [vmem:[#allocation5 + $0x288] sm:$0xff]
    %v151 = vld [vmem:[#allocation5 + $0x290] sm:$0xff]
    %v152 = vld [vmem:[#allocation5 + $0x298] sm:$0xff]
    %v153 = vld [vmem:[#allocation5 + $0x2a0] sm:$0xff]
    %v154 = vld [vmem:[#allocation5 + $0x2a8] sm:$0xff]
    %v155 = vld [vmem:[#allocation5 + $0x2b0] sm:$0xff]
    %v156 = vld [vmem:[#allocation5 + $0x2b8] sm:$0xff]
    %v157 = vld [vmem:[#allocation5 + $0x2c0] sm:$0xff]
    %v158 = vld [vmem:[#allocation5 + $0x2c8] sm:$0xff]
    %v159 = vld [vmem:[#allocation5 + $0x2d0] sm:$0xff]
    %v160 = vld [vmem:[#allocation5 + $0x2d8] sm:$0xff]
    %v161 = vld [vmem:[#allocation5 + $0x2e0] sm:$0xff]
    %v162 = vld [vmem:[#allocation5 + $0x2e8] sm:$0xff]
    %v163 = vld [vmem:[#allocation5 + $0x2f0] sm:$0xff]
    %v164 = vld [vmem:[#allocation5 + $0x2f8] sm:$0xff]
    %v165 = vld [vmem:[#allocation5 + $0x300] sm:$0xff]
    %v166 = vld [vmem:[#allocation5 + $0x308] sm:$0xff]
    %v167 = vld [vmem:[#allocation5 + $0x310] sm:$0xff]
    %v168 = vld [vmem:[#allocation5 + $0x318] sm:$0xff]
    %v169 = vld [vmem:[#allocation5 + $0x320] sm:$0xff]
    %v170 = vld [vmem:[#allocation5 + $0x328] sm:$0xff]
    %v171 = vld [vmem:[#allocation5 + $0x330] sm:$0xff]
    %v172 = vld [vmem:[#allocation5 + $0x338] sm:$0xff]
    %v173 = vld [vmem:[#allocation5 + $0x340] sm:$0xff]
    %v174 = vld [vmem:[#allocation5 + $0x348] sm:$0xff]
    %v175 = vld [vmem:[#allocation5 + $0x350] sm:$0xff]
    %v176 = vld [vmem:[#allocation5 + $0x358] sm:$0xff]
    %v177 = vld [vmem:[#allocation5 + $0x360] sm:$0xff]
    %v178 = vld [vmem:[#allocation5 + $0x368] sm:$0xff]
    %v179 = vld [vmem:[#allocation5 + $0x370] sm:$0xff]
    %v180 = vld [vmem:[#allocation5 + $0x378] sm:$0xff]
    %v181 = vld [vmem:[#allocation5 + $0x380] sm:$0xff]
    %v182 = vld [vmem:[#allocation5 + $0x388] sm:$0xff]
    %v183 = vld [vmem:[#allocation5 + $0x390] sm:$0xff]
    %v184 = vld [vmem:[#allocation5 + $0x398] sm:$0xff]
    %v185 = vld [vmem:[#allocation5 + $0x3a0] sm:$0xff]
    %v186 = vld [vmem:[#allocation5 + $0x3a8] sm:$0xff]
    %v187 = vld [vmem:[#allocation5 + $0x3b0] sm:$0xff]
    %v188 = vld [vmem:[#allocation5 + $0x3b8] sm:$0xff]
    %v189 = vld [vmem:[#allocation5 + $0x3c0] sm:$0xff]
    %v190 = vld [vmem:[#allocation5 + $0x3c8] sm:$0xff]
    %v191 = vld [vmem:[#allocation5 + $0x3d0] sm:$0xff]
    %v192 = vld [vmem:[#allocation5 + $0x3d8] sm:$0xff]
    %v193 = vld [vmem:[#allocation5 + $0x3e0] sm:$0xff]
    %v194 = vld [vmem:[#allocation5 + $0x3e8] sm:$0xff]
    %v195 = vld [vmem:[#allocation5 + $0x3f0] sm:$0xff]
    %v196 = vld [vmem:[#allocation5 + $0x3f8] sm:$0xff]
    %v197 = vld [vmem:[%s2] sm:$0xf]
    %v199 = vlaneseq
    %v200 = vshrl.u32 %v199, 7
    %v201 = vsub.s32 0, %v200
    %v202 = vrot.slane %v197, %v201
    %v203 = vlaneseq
    %v204 = vshrl.u32 %v203, 7
    %v205 = vsub.s32 1, %v204
    %v206 = vrot.slane %v197, %v205
    %v207 = vlaneseq
    %v208 = vshrl.u32 %v207, 7
    %v209 = vsub.s32 2, %v208
    %v210 = vrot.slane %v197, %v209
    %v211 = vlaneseq
    %v212 = vshrl.u32 %v211, 7
    %v213 = vsub.s32 3, %v212
    %v214 = vrot.slane %v197, %v213
    %v221 = vunpack.c.l.b16 %v67
    %v222 = vunpack.c.h.b16 %v67
    %v223 = vunpack.c.l.b16 %v68
    %v224 = vunpack.c.h.b16 %v68
    %v225 = vpack.c.b16 %v221, %v221
    %v226 = vpack.c.b16 %v222, %v222
    %v227 = vpack.c.b16 %v223, %v223
    %v228 = vpack.c.b16 %v224, %v224
    %v361 = vunpack.c.l.b16 %v69
    %v362 = vunpack.c.h.b16 %v69
    %v363 = vunpack.c.l.b16 %v70
    %v364 = vunpack.c.h.b16 %v70
    %v365 = vunpack.c.l.b16 %v71
    %v366 = vunpack.c.h.b16 %v71
    %v367 = vunpack.c.l.b16 %v72
    %v368 = vunpack.c.h.b16 %v72
    %v369 = vunpack.c.l.b16 %v73
    %v370 = vunpack.c.h.b16 %v73
    %v371 = vunpack.c.l.b16 %v74
    %v372 = vunpack.c.h.b16 %v74
    %v373 = vunpack.c.l.b16 %v75
    %v374 = vunpack.c.h.b16 %v75
    %v375 = vunpack.c.l.b16 %v76
    %v376 = vunpack.c.h.b16 %v76
    %v377 = vunpack.c.l.b16 %v77
    %v378 = vunpack.c.h.b16 %v77
    %v379 = vunpack.c.l.b16 %v78
    %v380 = vunpack.c.h.b16 %v78
    %v381 = vunpack.c.l.b16 %v79
    %v382 = vunpack.c.h.b16 %v79
    %v383 = vunpack.c.l.b16 %v80
    %v384 = vunpack.c.h.b16 %v80
    %v385 = vunpack.c.l.b16 %v81
    %v386 = vunpack.c.h.b16 %v81
    %v387 = vunpack.c.l.b16 %v82
    %v388 = vunpack.c.h.b16 %v82
    %v389 = vunpack.c.l.b16 %v83
    %v390 = vunpack.c.h.b16 %v83
    %v391 = vunpack.c.l.b16 %v84
    %v392 = vunpack.c.h.b16 %v84
    %v393 = vunpack.c.l.b16 %v85
    %v394 = vunpack.c.h.b16 %v85
    %v395 = vunpack.c.l.b16 %v86
    %v396 = vunpack.c.h.b16 %v86
    %v397 = vunpack.c.l.b16 %v87
    %v398 = vunpack.c.h.b16 %v87
    %v399 = vunpack.c.l.b16 %v88
    %v400 = vunpack.c.h.b16 %v88
    %v401 = vunpack.c.l.b16 %v89
    %v402 = vunpack.c.h.b16 %v89
    %v403 = vunpack.c.l.b16 %v90
    %v404 = vunpack.c.h.b16 %v90
    %v405 = vunpack.c.l.b16 %v91
    %v406 = vunpack.c.h.b16 %v91
    %v407 = vunpack.c.l.b16 %v92
    %v408 = vunpack.c.h.b16 %v92
    %v409 = vunpack.c.l.b16 %v93
    %v410 = vunpack.c.h.b16 %v93
    %v411 = vunpack.c.l.b16 %v94
    %v412 = vunpack.c.h.b16 %v94
    %v413 = vunpack.c.l.b16 %v95
    %v414 = vunpack.c.h.b16 %v95
    %v415 = vunpack.c.l.b16 %v96
    %v416 = vunpack.c.h.b16 %v96
    %v417 = vunpack.c.l.b16 %v97
    %v418 = vunpack.c.h.b16 %v97
    %v419 = vunpack.c.l.b16 %v98
    %v420 = vunpack.c.h.b16 %v98
    %v421 = vunpack.c.l.b16 %v99
    %v422 = vunpack.c.h.b16 %v99
    %v423 = vunpack.c.l.b16 %v100
    %v424 = vunpack.c.h.b16 %v100
    %v425 = vunpack.c.l.b16 %v101
    %v426 = vunpack.c.h.b16 %v101
    %v427 = vunpack.c.l.b16 %v102
    %v428 = vunpack.c.h.b16 %v102
    %v429 = vunpack.c.l.b16 %v103
    %v430 = vunpack.c.h.b16 %v103
    %v431 = vunpack.c.l.b16 %v104
    %v432 = vunpack.c.h.b16 %v104
    %v433 = vunpack.c.l.b16 %v105
    %v434 = vunpack.c.h.b16 %v105
    %v435 = vunpack.c.l.b16 %v106
    %v436 = vunpack.c.h.b16 %v106
    %v437 = vunpack.c.l.b16 %v107
    %v438 = vunpack.c.h.b16 %v107
    %v439 = vunpack.c.l.b16 %v108
    %v440 = vunpack.c.h.b16 %v108
    %v441 = vunpack.c.l.b16 %v109
    %v442 = vunpack.c.h.b16 %v109
    %v443 = vunpack.c.l.b16 %v110
    %v444 = vunpack.c.h.b16 %v110
    %v445 = vunpack.c.l.b16 %v111
    %v446 = vunpack.c.h.b16 %v111
    %v447 = vunpack.c.l.b16 %v112
    %v448 = vunpack.c.h.b16 %v112
    %v449 = vunpack.c.l.b16 %v113
    %v450 = vunpack.c.h.b16 %v113
    %v451 = vunpack.c.l.b16 %v114
    %v452 = vunpack.c.h.b16 %v114
    %v453 = vunpack.c.l.b16 %v115
    %v454 = vunpack.c.h.b16 %v115
    %v455 = vunpack.c.l.b16 %v116
    %v456 = vunpack.c.h.b16 %v116
    %v457 = vunpack.c.l.b16 %v117
    %v458 = vunpack.c.h.b16 %v117
    %v459 = vunpack.c.l.b16 %v118
    %v460 = vunpack.c.h.b16 %v118
    %v461 = vunpack.c.l.b16 %v119
    %v462 = vunpack.c.h.b16 %v119
    %v463 = vunpack.c.l.b16 %v120
    %v464 = vunpack.c.h.b16 %v120
    %v465 = vunpack.c.l.b16 %v121
    %v466 = vunpack.c.h.b16 %v121
    %v467 = vunpack.c.l.b16 %v122
    %v468 = vunpack.c.h.b16 %v122
    %v469 = vunpack.c.l.b16 %v123
    %v470 = vunpack.c.h.b16 %v123
    %v471 = vunpack.c.l.b16 %v124
    %v472 = vunpack.c.h.b16 %v124
    %v473 = vunpack.c.l.b16 %v125
    %v474 = vunpack.c.h.b16 %v125
    %v475 = vunpack.c.l.b16 %v126
    %v476 = vunpack.c.h.b16 %v126
    %v477 = vunpack.c.l.b16 %v127
    %v478 = vunpack.c.h.b16 %v127
    %v479 = vunpack.c.l.b16 %v128
    %v480 = vunpack.c.h.b16 %v128
    %v481 = vunpack.c.l.b16 %v129
    %v482 = vunpack.c.h.b16 %v129
    %v483 = vunpack.c.l.b16 %v130
    %v484 = vunpack.c.h.b16 %v130
    %v485 = vunpack.c.l.b16 %v131
    %v486 = vunpack.c.h.b16 %v131
    %v487 = vunpack.c.l.b16 %v132
    %v488 = vunpack.c.h.b16 %v132
    %v489 = vunpack.c.l.b16 %v133
    %v490 = vunpack.c.h.b16 %v133
    %v491 = vunpack.c.l.b16 %v134
    %v492 = vunpack.c.h.b16 %v134
    %v493 = vunpack.c.l.b16 %v135
    %v494 = vunpack.c.h.b16 %v135
    %v495 = vunpack.c.l.b16 %v136
    %v496 = vunpack.c.h.b16 %v136
    %v497 = vunpack.c.l.b16 %v137
    %v498 = vunpack.c.h.b16 %v137
    %v499 = vunpack.c.l.b16 %v138
    %v500 = vunpack.c.h.b16 %v138
    %v501 = vunpack.c.l.b16 %v139
    %v502 = vunpack.c.h.b16 %v139
    %v503 = vunpack.c.l.b16 %v140
    %v504 = vunpack.c.h.b16 %v140
    %v505 = vunpack.c.l.b16 %v141
    %v506 = vunpack.c.h.b16 %v141
    %v507 = vunpack.c.l.b16 %v142
    %v508 = vunpack.c.h.b16 %v142
    %v509 = vunpack.c.l.b16 %v143
    %v510 = vunpack.c.h.b16 %v143
    %v511 = vunpack.c.l.b16 %v144
    %v512 = vunpack.c.h.b16 %v144
    %v513 = vunpack.c.l.b16 %v145
    %v514 = vunpack.c.h.b16 %v145
    %v515 = vunpack.c.l.b16 %v146
    %v516 = vunpack.c.h.b16 %v146
    %v517 = vunpack.c.l.b16 %v147
    %v518 = vunpack.c.h.b16 %v147
    %v519 = vunpack.c.l.b16 %v148
    %v520 = vunpack.c.h.b16 %v148
    %v521 = vunpack.c.l.b16 %v149
    %v522 = vunpack.c.h.b16 %v149
    %v523 = vunpack.c.l.b16 %v150
    %v524 = vunpack.c.h.b16 %v150
    %v525 = vunpack.c.l.b16 %v151
    %v526 = vunpack.c.h.b16 %v151
    %v527 = vunpack.c.l.b16 %v152
    %v528 = vunpack.c.h.b16 %v152
    %v529 = vunpack.c.l.b16 %v153
    %v530 = vunpack.c.h.b16 %v153
    %v531 = vunpack.c.l.b16 %v154
    %v532 = vunpack.c.h.b16 %v154
    %v533 = vunpack.c.l.b16 %v155
    %v534 = vunpack.c.h.b16 %v155
    %v535 = vunpack.c.l.b16 %v156
    %v536 = vunpack.c.h.b16 %v156
    %v537 = vunpack.c.l.b16 %v157
    %v538 = vunpack.c.h.b16 %v157
    %v539 = vunpack.c.l.b16 %v158
    %v540 = vunpack.c.h.b16 %v158
    %v541 = vunpack.c.l.b16 %v159
    %v542 = vunpack.c.h.b16 %v159
    %v543 = vunpack.c.l.b16 %v160
    %v544 = vunpack.c.h.b16 %v160
    %v545 = vunpack.c.l.b16 %v161
    %v546 = vunpack.c.h.b16 %v161
    %v547 = vunpack.c.l.b16 %v162
    %v548 = vunpack.c.h.b16 %v162
    %v549 = vunpack.c.l.b16 %v163
    %v550 = vunpack.c.h.b16 %v163
    %v551 = vunpack.c.l.b16 %v164
    %v552 = vunpack.c.h.b16 %v164
    %v553 = vunpack.c.l.b16 %v165
    %v554 = vunpack.c.h.b16 %v165
    %v555 = vunpack.c.l.b16 %v166
    %v556 = vunpack.c.h.b16 %v166
    %v557 = vunpack.c.l.b16 %v167
    %v558 = vunpack.c.h.b16 %v167
    %v559 = vunpack.c.l.b16 %v168
    %v560 = vunpack.c.h.b16 %v168
    %v561 = vunpack.c.l.b16 %v169
    %v562 = vunpack.c.h.b16 %v169
    %v563 = vunpack.c.l.b16 %v170
    %v564 = vunpack.c.h.b16 %v170
    %v565 = vunpack.c.l.b16 %v171
    %v566 = vunpack.c.h.b16 %v171
    %v567 = vunpack.c.l.b16 %v172
    %v568 = vunpack.c.h.b16 %v172
    %v569 = vunpack.c.l.b16 %v173
    %v570 = vunpack.c.h.b16 %v173
    %v571 = vunpack.c.l.b16 %v174
    %v572 = vunpack.c.h.b16 %v174
    %v573 = vunpack.c.l.b16 %v175
    %v574 = vunpack.c.h.b16 %v175
    %v575 = vunpack.c.l.b16 %v176
    %v576 = vunpack.c.h.b16 %v176
    %v577 = vunpack.c.l.b16 %v177
    %v578 = vunpack.c.h.b16 %v177
    %v579 = vunpack.c.l.b16 %v178
    %v580 = vunpack.c.h.b16 %v178
    %v581 = vunpack.c.l.b16 %v179
    %v582 = vunpack.c.h.b16 %v179
    %v583 = vunpack.c.l.b16 %v180
    %v584 = vunpack.c.h.b16 %v180
    %v585 = vunpack.c.l.b16 %v181
    %v586 = vunpack.c.h.b16 %v181
    %v587 = vunpack.c.l.b16 %v182
    %v588 = vunpack.c.h.b16 %v182
    %v589 = vunpack.c.l.b16 %v183
    %v590 = vunpack.c.h.b16 %v183
    %v591 = vunpack.c.l.b16 %v184
    %v592 = vunpack.c.h.b16 %v184
    %v593 = vunpack.c.l.b16 %v185
    %v594 = vunpack.c.h.b16 %v185
    %v595 = vunpack.c.l.b16 %v186
    %v596 = vunpack.c.h.b16 %v186
    %v597 = vunpack.c.l.b16 %v187
    %v598 = vunpack.c.h.b16 %v187
    %v599 = vunpack.c.l.b16 %v188
    %v600 = vunpack.c.h.b16 %v188
    %v601 = vunpack.c.l.b16 %v189
    %v602 = vunpack.c.h.b16 %v189
    %v603 = vunpack.c.l.b16 %v190
    %v604 = vunpack.c.h.b16 %v190
    %v605 = vunpack.c.l.b16 %v191
    %v606 = vunpack.c.h.b16 %v191
    %v607 = vunpack.c.l.b16 %v192
    %v608 = vunpack.c.h.b16 %v192
    %v609 = vunpack.c.l.b16 %v193
    %v610 = vunpack.c.h.b16 %v193
    %v611 = vunpack.c.l.b16 %v194
    %v612 = vunpack.c.h.b16 %v194
    %v613 = vunpack.c.l.b16 %v195
    %v614 = vunpack.c.h.b16 %v195
    %v615 = vunpack.c.l.b16 %v196
    %v616 = vunpack.c.h.b16 %v196
    %v617 = vpack.c.b16 %v365, %v361
    %v618 = vpack.c.b16 %v366, %v362
    %v619 = vpack.c.b16 %v367, %v363
    %v620 = vpack.c.b16 %v368, %v364
    %v621 = vpack.c.b16 %v373, %v369
    %v622 = vpack.c.b16 %v374, %v370
    %v623 = vpack.c.b16 %v375, %v371
    %v624 = vpack.c.b16 %v376, %v372
    %v625 = vpack.c.b16 %v381, %v377
    %v626 = vpack.c.b16 %v382, %v378
    %v627 = vpack.c.b16 %v383, %v379
    %v628 = vpack.c.b16 %v384, %v380
    %v629 = vpack.c.b16 %v389, %v385
    %v630 = vpack.c.b16 %v390, %v386
    %v631 = vpack.c.b16 %v391, %v387
    %v632 = vpack.c.b16 %v392, %v388
    %v633 = vpack.c.b16 %v397, %v393
    %v634 = vpack.c.b16 %v398, %v394
    %v635 = vpack.c.b16 %v399, %v395
    %v636 = vpack.c.b16 %v400, %v396
    %v637 = vpack.c.b16 %v405, %v401
    %v638 = vpack.c.b16 %v406, %v402
    %v639 = vpack.c.b16 %v407, %v403
    %v640 = vpack.c.b16 %v408, %v404
    %v641 = vpack.c.b16 %v413, %v409
    %v642 = vpack.c.b16 %v414, %v410
    %v643 = vpack.c.b16 %v415, %v411
    %v644 = vpack.c.b16 %v416, %v412
    %v645 = vpack.c.b16 %v421, %v417
    %v646 = vpack.c.b16 %v422, %v418
    %v647 = vpack.c.b16 %v423, %v419
    %v648 = vpack.c.b16 %v424, %v420
    %v649 = vpack.c.b16 %v429, %v425
    %v650 = vpack.c.b16 %v430, %v426
    %v651 = vpack.c.b16 %v431, %v427
    %v652 = vpack.c.b16 %v432, %v428
    %v653 = vpack.c.b16 %v437, %v433
    %v654 = vpack.c.b16 %v438, %v434
    %v655 = vpack.c.b16 %v439, %v435
    %v656 = vpack.c.b16 %v440, %v436
    %v657 = vpack.c.b16 %v445, %v441
    %v658 = vpack.c.b16 %v446, %v442
    %v659 = vpack.c.b16 %v447, %v443
    %v660 = vpack.c.b16 %v448, %v444
    %v661 = vpack.c.b16 %v453, %v449
    %v662 = vpack.c.b16 %v454, %v450
    %v663 = vpack.c.b16 %v455, %v451
    %v664 = vpack.c.b16 %v456, %v452
    %v665 = vpack.c.b16 %v461, %v457
    %v666 = vpack.c.b16 %v462, %v458
    %v667 = vpack.c.b16 %v463, %v459
    %v668 = vpack.c.b16 %v464, %v460
    %v669 = vpack.c.b16 %v469, %v465
    %v670 = vpack.c.b16 %v470, %v466
    %v671 = vpack.c.b16 %v471, %v467
    %v672 = vpack.c.b16 %v472, %v468
    %v673 = vpack.c.b16 %v477, %v473
    %v674 = vpack.c.b16 %v478, %v474
    %v675 = vpack.c.b16 %v479, %v475
    %v676 = vpack.c.b16 %v480, %v476
    %v677 = vpack.c.b16 %v485, %v481
    %v678 = vpack.c.b16 %v486, %v482
    %v679 = vpack.c.b16 %v487, %v483
    %v680 = vpack.c.b16 %v488, %v484
    %v681 = vpack.c.b16 %v493, %v489
    %v682 = vpack.c.b16 %v494, %v490
    %v683 = vpack.c.b16 %v495, %v491
    %v684 = vpack.c.b16 %v496, %v492
    %v685 = vpack.c.b16 %v501, %v497
    %v686 = vpack.c.b16 %v502, %v498
    %v687 = vpack.c.b16 %v503, %v499
    %v688 = vpack.c.b16 %v504, %v500
    %v689 = vpack.c.b16 %v509, %v505
    %v690 = vpack.c.b16 %v510, %v506
    %v691 = vpack.c.b16 %v511, %v507
    %v692 = vpack.c.b16 %v512, %v508
    %v693 = vpack.c.b16 %v517, %v513
    %v694 = vpack.c.b16 %v518, %v514
    %v695 = vpack.c.b16 %v519, %v515
    %v696 = vpack.c.b16 %v520, %v516
    %v697 = vpack.c.b16 %v525, %v521
    %v698 = vpack.c.b16 %v526, %v522
    %v699 = vpack.c.b16 %v527, %v523
    %v700 = vpack.c.b16 %v528, %v524
    %v701 = vpack.c.b16 %v533, %v529
    %v702 = vpack.c.b16 %v534, %v530
    %v703 = vpack.c.b16 %v535, %v531
    %v704 = vpack.c.b16 %v536, %v532
    %v705 = vpack.c.b16 %v541, %v537
    %v706 = vpack.c.b16 %v542, %v538
    %v707 = vpack.c.b16 %v543, %v539
    %v708 = vpack.c.b16 %v544, %v540
    %v709 = vpack.c.b16 %v549, %v545
    %v710 = vpack.c.b16 %v550, %v546
    %v711 = vpack.c.b16 %v551, %v547
    %v712 = vpack.c.b16 %v552, %v548
    %v713 = vpack.c.b16 %v557, %v553
    %v714 = vpack.c.b16 %v558, %v554
    %v715 = vpack.c.b16 %v559, %v555
    %v716 = vpack.c.b16 %v560, %v556
    %v717 = vpack.c.b16 %v565, %v561
    %v718 = vpack.c.b16 %v566, %v562
    %v719 = vpack.c.b16 %v567, %v563
    %v720 = vpack.c.b16 %v568, %v564
    %v721 = vpack.c.b16 %v573, %v569
    %v722 = vpack.c.b16 %v574, %v570
    %v723 = vpack.c.b16 %v575, %v571
    %v724 = vpack.c.b16 %v576, %v572
    %v725 = vpack.c.b16 %v581, %v577
    %v726 = vpack.c.b16 %v582, %v578
    %v727 = vpack.c.b16 %v583, %v579
    %v728 = vpack.c.b16 %v584, %v580
    %v729 = vpack.c.b16 %v589, %v585
    %v730 = vpack.c.b16 %v590, %v586
    %v731 = vpack.c.b16 %v591, %v587
    %v732 = vpack.c.b16 %v592, %v588
    %v733 = vpack.c.b16 %v597, %v593
    %v734 = vpack.c.b16 %v598, %v594
    %v735 = vpack.c.b16 %v599, %v595
    %v736 = vpack.c.b16 %v600, %v596
    %v737 = vpack.c.b16 %v605, %v601
    %v738 = vpack.c.b16 %v606, %v602
    %v739 = vpack.c.b16 %v607, %v603
    %v740 = vpack.c.b16 %v608, %v604
    %v741 = vpack.c.b16 %v613, %v609
    %v742 = vpack.c.b16 %v614, %v610
    %v743 = vpack.c.b16 %v615, %v611
    %v744 = vpack.c.b16 %v616, %v612
    %873 = vmatprep.subr.bf16.mxu0 %v646
    %874 = vmatpush1.bf16.msra.mxu0 %v645
    %875 = vmatprep.subr.bf16.mxu0 %v642
    %876 = vmatpush1.bf16.msra.mxu0 %v641
    %877 = vmatprep.subr.bf16.mxu0 %v638
    %878 = vmatpush1.bf16.msra.mxu0 %v637
    %879 = vmatprep.subr.bf16.mxu0 %v634
    %880 = vmatpush1.bf16.msra.mxu0 %v633
    %881 = vmatprep.subr.bf16.mxu0 %v630
    %882 = vmatpush1.bf16.msra.mxu0 %v629
    %883 = vmatprep.subr.bf16.mxu0 %v626
    %884 = vmatpush1.bf16.msra.mxu0 %v625
    %885 = vmatprep.subr.bf16.mxu0 %v622
    %886 = vmatpush1.bf16.msra.mxu0 %v621
    %887 = vmatprep.subr.bf16.mxu0 %v618
    %888 = vmatpush1.bf16.msra.mxu0 %v617
    %889 = vmatprep.subr.bf16.mxu0 %v678
    %890 = vmatpush2.bf16.msra.mxu0 %v677
    %891 = vmatprep.subr.bf16.mxu0 %v674
    %892 = vmatpush2.bf16.msra.mxu0 %v673
    %893 = vmatprep.subr.bf16.mxu0 %v670
    %894 = vmatpush2.bf16.msra.mxu0 %v669
    %895 = vmatprep.subr.bf16.mxu0 %v666
    %896 = vmatpush2.bf16.msra.mxu0 %v665
    %897 = vmatprep.subr.bf16.mxu0 %v662
    %898 = vmatpush2.bf16.msra.mxu0 %v661
    %899 = vmatprep.subr.bf16.mxu0 %v658
    %900 = vmatpush2.bf16.msra.mxu0 %v657
    %901 = vmatprep.subr.bf16.mxu0 %v654
    %902 = vmatpush2.bf16.msra.mxu0 %v653
    %903 = vmatprep.subr.bf16.mxu0 %v650
    %904 = vmatpush2.bf16.msra.mxu0 %v649
    %905 = vmatprep.mubr.bf16.mxu0 %v226
    %906 = vmatmul.mubr.bf16.gmra.mxu0 %v225
    %v907 = vpop.f32.mrf.mxu0
    %v908 = vadd.f32 %v202, %v907
    %v909 = vpop.f32.mrf.mxu0
    %v910 = vadd.f32 %v206, %v909
    %v911 = vpop.f32.mrf.mxu0
    %v912 = vpop.f32.mrf.mxu0
    %913 = vdwg.mxu0
    %914 = vmatprep.subr.bf16.mxu0 %v710
    %915 = vmatpush1.bf16.msra.mxu0 %v709
    %916 = vmatprep.subr.bf16.mxu0 %v706
    %917 = vmatpush1.bf16.msra.mxu0 %v705
    %918 = vmatprep.subr.bf16.mxu0 %v702
    %919 = vmatpush1.bf16.msra.mxu0 %v701
    %920 = vmatprep.subr.bf16.mxu0 %v698
    %921 = vmatpush1.bf16.msra.mxu0 %v697
    %922 = vmatprep.subr.bf16.mxu0 %v694
    %923 = vmatpush1.bf16.msra.mxu0 %v693
    %924 = vmatprep.subr.bf16.mxu0 %v690
    %925 = vmatpush1.bf16.msra.mxu0 %v689
    %926 = vmatprep.subr.bf16.mxu0 %v686
    %927 = vmatpush1.bf16.msra.mxu0 %v685
    %928 = vmatprep.subr.bf16.mxu0 %v682
    %929 = vmatpush1.bf16.msra.mxu0 %v681
    %930 = vmatprep.subr.bf16.mxu0 %v742
    %931 = vmatpush2.bf16.msra.mxu0 %v741
    %932 = vmatprep.subr.bf16.mxu0 %v738
    %933 = vmatpush2.bf16.msra.mxu0 %v737
    %934 = vmatprep.subr.bf16.mxu0 %v734
    %935 = vmatpush2.bf16.msra.mxu0 %v733
    %936 = vmatprep.subr.bf16.mxu0 %v730
    %937 = vmatpush2.bf16.msra.mxu0 %v729
    %938 = vmatprep.subr.bf16.mxu0 %v726
    %939 = vmatpush2.bf16.msra.mxu0 %v725
    %940 = vmatprep.subr.bf16.mxu0 %v722
    %941 = vmatpush2.bf16.msra.mxu0 %v721
    %942 = vmatprep.subr.bf16.mxu0 %v718
    %943 = vmatpush2.bf16.msra.mxu0 %v717
    %944 = vmatprep.subr.bf16.mxu0 %v714
    %945 = vmatpush2.bf16.msra.mxu0 %v713
    %946 = vmatprep.mubr.bf16.mxu0 %v228
    %947 = vmatmul.mubr.bf16.gmra.mxu0 %v227
    %v948 = vpop.f32.mrf.mxu0
    %v949 = vadd.f32 %v908, %v948
    %v950 = vpop.f32.mrf.mxu0
    %v951 = vadd.f32 %v910, %v950
    %v952 = vpop.f32.mrf.mxu0
    %v953 = vpop.f32.mrf.mxu0
    %954 = vdwg.mxu0
    %955 = vmatprep.subr.bf16.mxu0 %v648
    %956 = vmatpush1.bf16.msra.mxu0 %v647
    %957 = vmatprep.subr.bf16.mxu0 %v644
    %958 = vmatpush1.bf16.msra.mxu0 %v643
    %959 = vmatprep.subr.bf16.mxu0 %v640
    %960 = vmatpush1.bf16.msra.mxu0 %v639
    %961 = vmatprep.subr.bf16.mxu0 %v636
    %962 = vmatpush1.bf16.msra.mxu0 %v635
    %963 = vmatprep.subr.bf16.mxu0 %v632
    %964 = vmatpush1.bf16.msra.mxu0 %v631
    %965 = vmatprep.subr.bf16.mxu0 %v628
    %966 = vmatpush1.bf16.msra.mxu0 %v627
    %967 = vmatprep.subr.bf16.mxu0 %v624
    %968 = vmatpush1.bf16.msra.mxu0 %v623
    %969 = vmatprep.subr.bf16.mxu0 %v620
    %970 = vmatpush1.bf16.msra.mxu0 %v619
    %971 = vmatprep.subr.bf16.mxu0 %v680
    %972 = vmatpush2.bf16.msra.mxu0 %v679
    %973 = vmatprep.subr.bf16.mxu0 %v676
    %974 = vmatpush2.bf16.msra.mxu0 %v675
    %975 = vmatprep.subr.bf16.mxu0 %v672
    %976 = vmatpush2.bf16.msra.mxu0 %v671
    %977 = vmatprep.subr.bf16.mxu0 %v668
    %978 = vmatpush2.bf16.msra.mxu0 %v667
    %979 = vmatprep.subr.bf16.mxu0 %v664
    %980 = vmatpush2.bf16.msra.mxu0 %v663
    %981 = vmatprep.subr.bf16.mxu0 %v660
    %982 = vmatpush2.bf16.msra.mxu0 %v659
    %983 = vmatprep.subr.bf16.mxu0 %v656
    %984 = vmatpush2.bf16.msra.mxu0 %v655
    %985 = vmatprep.subr.bf16.mxu0 %v652
    %986 = vmatpush2.bf16.msra.mxu0 %v651
    %987 = vmatprep.mubr.bf16.mxu0 %v226
    %988 = vmatmul.mubr.bf16.gmra.mxu0 %v225
    %v989 = vpop.f32.mrf.mxu0
    %v990 = vadd.f32 %v210, %v989
    %v991 = vpop.f32.mrf.mxu0
    %v992 = vadd.f32 %v214, %v991
    %v993 = vpop.f32.mrf.mxu0
    %v994 = vpop.f32.mrf.mxu0
    %995 = vdwg.mxu0
    %996 = vmatprep.subr.bf16.mxu0 %v712
    %997 = vmatpush1.bf16.msra.mxu0 %v711
    %998 = vmatprep.subr.bf16.mxu0 %v708
    %999 = vmatpush1.bf16.msra.mxu0 %v707
    %1000 = vmatprep.subr.bf16.mxu0 %v704
    %1001 = vmatpush1.bf16.msra.mxu0 %v703
    %1002 = vmatprep.subr.bf16.mxu0 %v700
    %1003 = vmatpush1.bf16.msra.mxu0 %v699
    %1004 = vmatprep.subr.bf16.mxu0 %v696
    %1005 = vmatpush1.bf16.msra.mxu0 %v695
    %1006 = vmatprep.subr.bf16.mxu0 %v692
    %1007 = vmatpush1.bf16.msra.mxu0 %v691
    %1008 = vmatprep.subr.bf16.mxu0 %v688
    %1009 = vmatpush1.bf16.msra.mxu0 %v687
    %1010 = vmatprep.subr.bf16.mxu0 %v684
    %1011 = vmatpush1.bf16.msra.mxu0 %v683
    %1012 = vmatprep.subr.bf16.mxu0 %v744
    %1013 = vmatpush2.bf16.msra.mxu0 %v743
    %1014 = vmatprep.subr.bf16.mxu0 %v740
    %1015 = vmatpush2.bf16.msra.mxu0 %v739
    %1016 = vmatprep.subr.bf16.mxu0 %v736
    %1017 = vmatpush2.bf16.msra.mxu0 %v735
    %1018 = vmatprep.subr.bf16.mxu0 %v732
    %1019 = vmatpush2.bf16.msra.mxu0 %v731
    %1020 = vmatprep.subr.bf16.mxu0 %v728
    %1021 = vmatpush2.bf16.msra.mxu0 %v727
    %1022 = vmatprep.subr.bf16.mxu0 %v724
    %1023 = vmatpush2.bf16.msra.mxu0 %v723
    %1024 = vmatprep.subr.bf16.mxu0 %v720
    %1025 = vmatpush2.bf16.msra.mxu0 %v719
    %1026 = vmatprep.subr.bf16.mxu0 %v716
    %1027 = vmatpush2.bf16.msra.mxu0 %v715
    %1028 = vmatprep.mubr.bf16.mxu0 %v228
    %1029 = vmatmul.mubr.bf16.gmra.mxu0 %v227
    %v1030 = vpop.f32.mrf.mxu0
    %v1031 = vadd.f32 %v990, %v1030
    %v1032 = vpop.f32.mrf.mxu0
    %v1033 = vadd.f32 %v992, %v1032
    %v1034 = vpop.f32.mrf.mxu0
    %v1035 = vpop.f32.mrf.mxu0
    %1036 = vdwg.mxu0
    %v1037 = vmax.f32 %v949, 0.0
    %v1038 = vmax.f32 %v951, 0.0
    %v1039 = vmax.f32 %v1031, 0.0
    %v1040 = vmax.f32 %v1033, 0.0
    %v1041 = vpack.c.bf16 %v1037, %v1037
    %v1042 = vpack.c.bf16 %v1038, %v1038
    %v1043 = vpack.c.bf16 %v1039, %v1039
    %v1044 = vpack.c.bf16 %v1040, %v1040
    %v1045 = vld [vmem:[#allocation7] sm:$0xff]
    %v1046 = vld [vmem:[#allocation7 + $0x8] sm:$0xff]
    %v1047 = vld [vmem:[#allocation7 + $0x10] sm:$0xff]
    %v1048 = vld [vmem:[#allocation7 + $0x18] sm:$0xff]
    %v1049 = vld [vmem:[#allocation7 + $0x20] sm:$0xff]
    %v1050 = vld [vmem:[#allocation7 + $0x28] sm:$0xff]
    %v1051 = vld [vmem:[#allocation7 + $0x30] sm:$0xff]
    %v1052 = vld [vmem:[#allocation7 + $0x38] sm:$0xff]
    %v1053 = vld [vmem:[#allocation7 + $0x40] sm:$0xff]
    %v1054 = vld [vmem:[#allocation7 + $0x48] sm:$0xff]
    %v1055 = vld [vmem:[#allocation7 + $0x50] sm:$0xff]
    %v1056 = vld [vmem:[#allocation7 + $0x58] sm:$0xff]
    %v1057 = vld [vmem:[#allocation7 + $0x60] sm:$0xff]
    %v1058 = vld [vmem:[#allocation7 + $0x68] sm:$0xff]
    %v1059 = vld [vmem:[#allocation7 + $0x70] sm:$0xff]
    %v1060 = vld [vmem:[#allocation7 + $0x78] sm:$0xff]
    %v1061 = vld [vmem:[#allocation7 + $0x80] sm:$0xff]
    %v1062 = vld [vmem:[#allocation7 + $0x88] sm:$0xff]
    %v1063 = vld [vmem:[#allocation7 + $0x90] sm:$0xff]
    %v1064 = vld [vmem:[#allocation7 + $0x98] sm:$0xff]
    %v1065 = vld [vmem:[#allocation7 + $0xa0] sm:$0xff]
    %v1066 = vld [vmem:[#allocation7 + $0xa8] sm:$0xff]
    %v1067 = vld [vmem:[#allocation7 + $0xb0] sm:$0xff]
    %v1068 = vld [vmem:[#allocation7 + $0xb8] sm:$0xff]
    %v1069 = vld [vmem:[#allocation7 + $0xc0] sm:$0xff]
    %v1070 = vld [vmem:[#allocation7 + $0xc8] sm:$0xff]
    %v1071 = vld [vmem:[#allocation7 + $0xd0] sm:$0xff]
    %v1072 = vld [vmem:[#allocation7 + $0xd8] sm:$0xff]
    %v1073 = vld [vmem:[#allocation7 + $0xe0] sm:$0xff]
    %v1074 = vld [vmem:[#allocation7 + $0xe8] sm:$0xff]
    %v1075 = vld [vmem:[#allocation7 + $0xf0] sm:$0xff]
    %v1076 = vld [vmem:[#allocation7 + $0xf8] sm:$0xff]
    %v1077 = vld [vmem:[#allocation7 + $0x100] sm:$0xff]
    %v1078 = vld [vmem:[#allocation7 + $0x108] sm:$0xff]
    %v1079 = vld [vmem:[#allocation7 + $0x110] sm:$0xff]
    %v1080 = vld [vmem:[#allocation7 + $0x118] sm:$0xff]
    %v1081 = vld [vmem:[#allocation7 + $0x120] sm:$0xff]
    %v1082 = vld [vmem:[#allocation7 + $0x128] sm:$0xff]
    %v1083 = vld [vmem:[#allocation7 + $0x130] sm:$0xff]
    %v1084 = vld [vmem:[#allocation7 + $0x138] sm:$0xff]
    %v1085 = vld [vmem:[#allocation7 + $0x140] sm:$0xff]
    %v1086 = vld [vmem:[#allocation7 + $0x148] sm:$0xff]
    %v1087 = vld [vmem:[#allocation7 + $0x150] sm:$0xff]
    %v1088 = vld [vmem:[#allocation7 + $0x158] sm:$0xff]
    %v1089 = vld [vmem:[#allocation7 + $0x160] sm:$0xff]
    %v1090 = vld [vmem:[#allocation7 + $0x168] sm:$0xff]
    %v1091 = vld [vmem:[#allocation7 + $0x170] sm:$0xff]
    %v1092 = vld [vmem:[#allocation7 + $0x178] sm:$0xff]
    %v1093 = vld [vmem:[#allocation7 + $0x180] sm:$0xff]
    %v1094 = vld [vmem:[#allocation7 + $0x188] sm:$0xff]
    %v1095 = vld [vmem:[#allocation7 + $0x190] sm:$0xff]
    %v1096 = vld [vmem:[#allocation7 + $0x198] sm:$0xff]
    %v1097 = vld [vmem:[#allocation7 + $0x1a0] sm:$0xff]
    %v1098 = vld [vmem:[#allocation7 + $0x1a8] sm:$0xff]
    %v1099 = vld [vmem:[#allocation7 + $0x1b0] sm:$0xff]
    %v1100 = vld [vmem:[#allocation7 + $0x1b8] sm:$0xff]
    %v1101 = vld [vmem:[#allocation7 + $0x1c0] sm:$0xff]
    %v1102 = vld [vmem:[#allocation7 + $0x1c8] sm:$0xff]
    %v1103 = vld [vmem:[#allocation7 + $0x1d0] sm:$0xff]
    %v1104 = vld [vmem:[#allocation7 + $0x1d8] sm:$0xff]
    %v1105 = vld [vmem:[#allocation7 + $0x1e0] sm:$0xff]
    %v1106 = vld [vmem:[#allocation7 + $0x1e8] sm:$0xff]
    %v1107 = vld [vmem:[#allocation7 + $0x1f0] sm:$0xff]
    %v1108 = vld [vmem:[#allocation7 + $0x1f8] sm:$0xff]
    %v1109 = vld [vmem:[%s4] sm:$0x3]
    %v1111 = vlaneseq
    %v1112 = vshrl.u32 %v1111, 7
    %v1113 = vsub.s32 0, %v1112
    %v1114 = vrot.slane %v1109, %v1113
    %v1115 = vlaneseq
    %v1116 = vshrl.u32 %v1115, 7
    %v1117 = vsub.s32 1, %v1116
    %v1118 = vrot.slane %v1109, %v1117
    %v1185 = vunpack.c.l.b16 %v1045
    %v1186 = vunpack.c.h.b16 %v1045
    %v1187 = vunpack.c.l.b16 %v1046
    %v1188 = vunpack.c.h.b16 %v1046
    %v1189 = vunpack.c.l.b16 %v1047
    %v1190 = vunpack.c.h.b16 %v1047
    %v1191 = vunpack.c.l.b16 %v1048
    %v1192 = vunpack.c.h.b16 %v1048
    %v1193 = vunpack.c.l.b16 %v1049
    %v1194 = vunpack.c.h.b16 %v1049
    %v1195 = vunpack.c.l.b16 %v1050
    %v1196 = vunpack.c.h.b16 %v1050
    %v1197 = vunpack.c.l.b16 %v1051
    %v1198 = vunpack.c.h.b16 %v1051
    %v1199 = vunpack.c.l.b16 %v1052
    %v1200 = vunpack.c.h.b16 %v1052
    %v1201 = vunpack.c.l.b16 %v1053
    %v1202 = vunpack.c.h.b16 %v1053
    %v1203 = vunpack.c.l.b16 %v1054
    %v1204 = vunpack.c.h.b16 %v1054
    %v1205 = vunpack.c.l.b16 %v1055
    %v1206 = vunpack.c.h.b16 %v1055
    %v1207 = vunpack.c.l.b16 %v1056
    %v1208 = vunpack.c.h.b16 %v1056
    %v1209 = vunpack.c.l.b16 %v1057
    %v1210 = vunpack.c.h.b16 %v1057
    %v1211 = vunpack.c.l.b16 %v1058
    %v1212 = vunpack.c.h.b16 %v1058
    %v1213 = vunpack.c.l.b16 %v1059
    %v1214 = vunpack.c.h.b16 %v1059
    %v1215 = vunpack.c.l.b16 %v1060
    %v1216 = vunpack.c.h.b16 %v1060
    %v1217 = vunpack.c.l.b16 %v1061
    %v1218 = vunpack.c.h.b16 %v1061
    %v1219 = vunpack.c.l.b16 %v1062
    %v1220 = vunpack.c.h.b16 %v1062
    %v1221 = vunpack.c.l.b16 %v1063
    %v1222 = vunpack.c.h.b16 %v1063
    %v1223 = vunpack.c.l.b16 %v1064
    %v1224 = vunpack.c.h.b16 %v1064
    %v1225 = vunpack.c.l.b16 %v1065
    %v1226 = vunpack.c.h.b16 %v1065
    %v1227 = vunpack.c.l.b16 %v1066
    %v1228 = vunpack.c.h.b16 %v1066
    %v1229 = vunpack.c.l.b16 %v1067
    %v1230 = vunpack.c.h.b16 %v1067
    %v1231 = vunpack.c.l.b16 %v1068
    %v1232 = vunpack.c.h.b16 %v1068
    %v1233 = vunpack.c.l.b16 %v1069
    %v1234 = vunpack.c.h.b16 %v1069
    %v1235 = vunpack.c.l.b16 %v1070
    %v1236 = vunpack.c.h.b16 %v1070
    %v1237 = vunpack.c.l.b16 %v1071
    %v1238 = vunpack.c.h.b16 %v1071
    %v1239 = vunpack.c.l.b16 %v1072
    %v1240 = vunpack.c.h.b16 %v1072
    %v1241 = vunpack.c.l.b16 %v1073
    %v1242 = vunpack.c.h.b16 %v1073
    %v1243 = vunpack.c.l.b16 %v1074
    %v1244 = vunpack.c.h.b16 %v1074
    %v1245 = vunpack.c.l.b16 %v1075
    %v1246 = vunpack.c.h.b16 %v1075
    %v1247 = vunpack.c.l.b16 %v1076
    %v1248 = vunpack.c.h.b16 %v1076
    %v1249 = vunpack.c.l.b16 %v1077
    %v1250 = vunpack.c.h.b16 %v1077
    %v1251 = vunpack.c.l.b16 %v1078
    %v1252 = vunpack.c.h.b16 %v1078
    %v1253 = vunpack.c.l.b16 %v1079
    %v1254 = vunpack.c.h.b16 %v1079
    %v1255 = vunpack.c.l.b16 %v1080
    %v1256 = vunpack.c.h.b16 %v1080
    %v1257 = vunpack.c.l.b16 %v1081
    %v1258 = vunpack.c.h.b16 %v1081
    %v1259 = vunpack.c.l.b16 %v1082
    %v1260 = vunpack.c.h.b16 %v1082
    %v1261 = vunpack.c.l.b16 %v1083
    %v1262 = vunpack.c.h.b16 %v1083
    %v1263 = vunpack.c.l.b16 %v1084
    %v1264 = vunpack.c.h.b16 %v1084
    %v1265 = vunpack.c.l.b16 %v1085
    %v1266 = vunpack.c.h.b16 %v1085
    %v1267 = vunpack.c.l.b16 %v1086
    %v1268 = vunpack.c.h.b16 %v1086
    %v1269 = vunpack.c.l.b16 %v1087
    %v1270 = vunpack.c.h.b16 %v1087
    %v1271 = vunpack.c.l.b16 %v1088
    %v1272 = vunpack.c.h.b16 %v1088
    %v1273 = vunpack.c.l.b16 %v1089
    %v1274 = vunpack.c.h.b16 %v1089
    %v1275 = vunpack.c.l.b16 %v1090
    %v1276 = vunpack.c.h.b16 %v1090
    %v1277 = vunpack.c.l.b16 %v1091
    %v1278 = vunpack.c.h.b16 %v1091
    %v1279 = vunpack.c.l.b16 %v1092
    %v1280 = vunpack.c.h.b16 %v1092
    %v1281 = vunpack.c.l.b16 %v1093
    %v1282 = vunpack.c.h.b16 %v1093
    %v1283 = vunpack.c.l.b16 %v1094
    %v1284 = vunpack.c.h.b16 %v1094
    %v1285 = vunpack.c.l.b16 %v1095
    %v1286 = vunpack.c.h.b16 %v1095
    %v1287 = vunpack.c.l.b16 %v1096
    %v1288 = vunpack.c.h.b16 %v1096
    %v1289 = vunpack.c.l.b16 %v1097
    %v1290 = vunpack.c.h.b16 %v1097
    %v1291 = vunpack.c.l.b16 %v1098
    %v1292 = vunpack.c.h.b16 %v1098
    %v1293 = vunpack.c.l.b16 %v1099
    %v1294 = vunpack.c.h.b16 %v1099
    %v1295 = vunpack.c.l.b16 %v1100
    %v1296 = vunpack.c.h.b16 %v1100
    %v1297 = vunpack.c.l.b16 %v1101
    %v1298 = vunpack.c.h.b16 %v1101
    %v1299 = vunpack.c.l.b16 %v1102
    %v1300 = vunpack.c.h.b16 %v1102
    %v1301 = vunpack.c.l.b16 %v1103
    %v1302 = vunpack.c.h.b16 %v1103
    %v1303 = vunpack.c.l.b16 %v1104
    %v1304 = vunpack.c.h.b16 %v1104
    %v1305 = vunpack.c.l.b16 %v1105
    %v1306 = vunpack.c.h.b16 %v1105
    %v1307 = vunpack.c.l.b16 %v1106
    %v1308 = vunpack.c.h.b16 %v1106
    %v1309 = vunpack.c.l.b16 %v1107
    %v1310 = vunpack.c.h.b16 %v1107
    %v1311 = vunpack.c.l.b16 %v1108
    %v1312 = vunpack.c.h.b16 %v1108
    %v1313 = vpack.c.b16 %v1187, %v1185
    %v1314 = vpack.c.b16 %v1188, %v1186
    %v1315 = vpack.c.b16 %v1191, %v1189
    %v1316 = vpack.c.b16 %v1192, %v1190
    %v1317 = vpack.c.b16 %v1195, %v1193
    %v1318 = vpack.c.b16 %v1196, %v1194
    %v1319 = vpack.c.b16 %v1199, %v1197
    %v1320 = vpack.c.b16 %v1200, %v1198
    %v1321 = vpack.c.b16 %v1203, %v1201
    %v1322 = vpack.c.b16 %v1204, %v1202
    %v1323 = vpack.c.b16 %v1207, %v1205
    %v1324 = vpack.c.b16 %v1208, %v1206
    %v1325 = vpack.c.b16 %v1211, %v1209
    %v1326 = vpack.c.b16 %v1212, %v1210
    %v1327 = vpack.c.b16 %v1215, %v1213
    %v1328 = vpack.c.b16 %v1216, %v1214
    %v1329 = vpack.c.b16 %v1219, %v1217
    %v1330 = vpack.c.b16 %v1220, %v1218
    %v1331 = vpack.c.b16 %v1223, %v1221
    %v1332 = vpack.c.b16 %v1224, %v1222
    %v1333 = vpack.c.b16 %v1227, %v1225
    %v1334 = vpack.c.b16 %v1228, %v1226
    %v1335 = vpack.c.b16 %v1231, %v1229
    %v1336 = vpack.c.b16 %v1232, %v1230
    %v1337 = vpack.c.b16 %v1235, %v1233
    %v1338 = vpack.c.b16 %v1236, %v1234
    %v1339 = vpack.c.b16 %v1239, %v1237
    %v1340 = vpack.c.b16 %v1240, %v1238
    %v1341 = vpack.c.b16 %v1243, %v1241
    %v1342 = vpack.c.b16 %v1244, %v1242
    %v1343 = vpack.c.b16 %v1247, %v1245
    %v1344 = vpack.c.b16 %v1248, %v1246
    %v1345 = vpack.c.b16 %v1251, %v1249
    %v1346 = vpack.c.b16 %v1252, %v1250
    %v1347 = vpack.c.b16 %v1255, %v1253
    %v1348 = vpack.c.b16 %v1256, %v1254
    %v1349 = vpack.c.b16 %v1259, %v1257
    %v1350 = vpack.c.b16 %v1260, %v1258
    %v1351 = vpack.c.b16 %v1263, %v1261
    %v1352 = vpack.c.b16 %v1264, %v1262
    %v1353 = vpack.c.b16 %v1267, %v1265
    %v1354 = vpack.c.b16 %v1268, %v1266
    %v1355 = vpack.c.b16 %v1271, %v1269
    %v1356 = vpack.c.b16 %v1272, %v1270
    %v1357 = vpack.c.b16 %v1275, %v1273
    %v1358 = vpack.c.b16 %v1276, %v1274
    %v1359 = vpack.c.b16 %v1279, %v1277
    %v1360 = vpack.c.b16 %v1280, %v1278
    %v1361 = vpack.c.b16 %v1283, %v1281
    %v1362 = vpack.c.b16 %v1284, %v1282
    %v1363 = vpack.c.b16 %v1287, %v1285
    %v1364 = vpack.c.b16 %v1288, %v1286
    %v1365 = vpack.c.b16 %v1291, %v1289
    %v1366 = vpack.c.b16 %v1292, %v1290
    %v1367 = vpack.c.b16 %v1295, %v1293
    %v1368 = vpack.c.b16 %v1296, %v1294
    %v1369 = vpack.c.b16 %v1299, %v1297
    %v1370 = vpack.c.b16 %v1300, %v1298
    %v1371 = vpack.c.b16 %v1303, %v1301
    %v1372 = vpack.c.b16 %v1304, %v1302
    %v1373 = vpack.c.b16 %v1307, %v1305
    %v1374 = vpack.c.b16 %v1308, %v1306
    %v1375 = vpack.c.b16 %v1311, %v1309
    %v1376 = vpack.c.b16 %v1312, %v1310
    %1441 = vmatprep.subr.bf16.mxu0 %v1328
    %1442 = vmatpush1.bf16.msra.mxu0 %v1327
    %1443 = vmatprep.subr.bf16.mxu0 %v1326
    %1444 = vmatpush1.bf16.msra.mxu0 %v1325
    %1445 = vmatprep.subr.bf16.mxu0 %v1324
    %1446 = vmatpush1.bf16.msra.mxu0 %v1323
    %1447 = vmatprep.subr.bf16.mxu0 %v1322
    %1448 = vmatpush1.bf16.msra.mxu0 %v1321
    %1449 = vmatprep.subr.bf16.mxu0 %v1320
    %1450 = vmatpush1.bf16.msra.mxu0 %v1319
    %1451 = vmatprep.subr.bf16.mxu0 %v1318
    %1452 = vmatpush1.bf16.msra.mxu0 %v1317
    %1453 = vmatprep.subr.bf16.mxu0 %v1316
    %1454 = vmatpush1.bf16.msra.mxu0 %v1315
    %1455 = vmatprep.subr.bf16.mxu0 %v1314
    %1456 = vmatpush1.bf16.msra.mxu0 %v1313
    %1457 = vmatprep.subr.bf16.mxu0 %v1344
    %1458 = vmatpush2.bf16.msra.mxu0 %v1343
    %1459 = vmatprep.subr.bf16.mxu0 %v1342
    %1460 = vmatpush2.bf16.msra.mxu0 %v1341
    %1461 = vmatprep.subr.bf16.mxu0 %v1340
    %1462 = vmatpush2.bf16.msra.mxu0 %v1339
    %1463 = vmatprep.subr.bf16.mxu0 %v1338
    %1464 = vmatpush2.bf16.msra.mxu0 %v1337
    %1465 = vmatprep.subr.bf16.mxu0 %v1336
    %1466 = vmatpush2.bf16.msra.mxu0 %v1335
    %1467 = vmatprep.subr.bf16.mxu0 %v1334
    %1468 = vmatpush2.bf16.msra.mxu0 %v1333
    %1469 = vmatprep.subr.bf16.mxu0 %v1332
    %1470 = vmatpush2.bf16.msra.mxu0 %v1331
    %1471 = vmatprep.subr.bf16.mxu0 %v1330
    %1472 = vmatpush2.bf16.msra.mxu0 %v1329
    %1473 = vmatprep.mubr.bf16.mxu0 %v1042
    %1474 = vmatmul.mubr.bf16.gmra.mxu0 %v1041
    %v1475 = vpop.f32.mrf.mxu0
    %v1476 = vadd.f32 %v1114, %v1475
    %v1477 = vpop.f32.mrf.mxu0
    %v1478 = vadd.f32 %v1118, %v1477
    %v1479 = vpop.f32.mrf.mxu0
    %v1480 = vpop.f32.mrf.mxu0
    %1481 = vdwg.mxu0
    %1482 = vmatprep.subr.bf16.mxu0 %v1360
    %1483 = vmatpush1.bf16.msra.mxu0 %v1359
    %1484 = vmatprep.subr.bf16.mxu0 %v1358
    %1485 = vmatpush1.bf16.msra.mxu0 %v1357
    %1486 = vmatprep.subr.bf16.mxu0 %v1356
    %1487 = vmatpush1.bf16.msra.mxu0 %v1355
    %1488 = vmatprep.subr.bf16.mxu0 %v1354
    %1489 = vmatpush1.bf16.msra.mxu0 %v1353
    %1490 = vmatprep.subr.bf16.mxu0 %v1352
    %1491 = vmatpush1.bf16.msra.mxu0 %v1351
    %1492 = vmatprep.subr.bf16.mxu0 %v1350
    %1493 = vmatpush1.bf16.msra.mxu0 %v1349
    %1494 = vmatprep.subr.bf16.mxu0 %v1348
    %1495 = vmatpush1.bf16.msra.mxu0 %v1347
    %1496 = vmatprep.subr.bf16.mxu0 %v1346
    %1497 = vmatpush1.bf16.msra.mxu0 %v1345
    %1498 = vmatprep.subr.bf16.mxu0 %v1376
    %1499 = vmatpush2.bf16.msra.mxu0 %v1375
    %1500 = vmatprep.subr.bf16.mxu0 %v1374
    %1501 = vmatpush2.bf16.msra.mxu0 %v1373
    %1502 = vmatprep.subr.bf16.mxu0 %v1372
    %1503 = vmatpush2.bf16.msra.mxu0 %v1371
    %1504 = vmatprep.subr.bf16.mxu0 %v1370
    %1505 = vmatpush2.bf16.msra.mxu0 %v1369
    %1506 = vmatprep.subr.bf16.mxu0 %v1368
    %1507 = vmatpush2.bf16.msra.mxu0 %v1367
    %1508 = vmatprep.subr.bf16.mxu0 %v1366
    %1509 = vmatpush2.bf16.msra.mxu0 %v1365
    %1510 = vmatprep.subr.bf16.mxu0 %v1364
    %1511 = vmatpush2.bf16.msra.mxu0 %v1363
    %1512 = vmatprep.subr.bf16.mxu0 %v1362
    %1513 = vmatpush2.bf16.msra.mxu0 %v1361
    %1514 = vmatprep.mubr.bf16.mxu0 %v1044
    %1515 = vmatmul.mubr.bf16.gmra.mxu0 %v1043
    %v1516 = vpop.f32.mrf.mxu0
    %v1517 = vadd.f32 %v1476, %v1516
    %v1518 = vpop.f32.mrf.mxu0
    %v1519 = vadd.f32 %v1478, %v1518
    %v1520 = vpop.f32.mrf.mxu0
    %v1521 = vpop.f32.mrf.mxu0
    %1522 = vdwg.mxu0
    %v1523 = vmax.f32 %v1517, 0.0
    %v1524 = vmax.f32 %v1519, 0.0
    %v1525 = vld [vmem:[%s5] sm:$0x3]
    %v1527 = vlaneseq
    %v1528 = vshrl.u32 %v1527, 7
    %v1529 = vsub.s32 0, %v1528
    %v1530 = vrot.slane %v1525, %v1529
    %v1531 = vlaneseq
    %v1532 = vshrl.u32 %v1531, 7
    %v1533 = vsub.s32 1, %v1532
    %v1534 = vrot.slane %v1525, %v1533
    %v1537 = vmul.f32 %v1523, %v1530
    %v1538 = vmul.f32 %v1524, %v1534
    %v1539 = vadd.f32 %v1537, %v1538
    %1540 = vadd.xlane.f32.xlu0 %v1539
    %v1541 = vpop.xlane.xlu0 %1540
    %v1542 = vld [vmem:[#allocation2] sm:$0x1]
    %v1544 = vlaneseq
    %v1545 = vshrl.u32 %v1544, 7
    %v1546 = vsub.s32 0, %v1545
    %v1547 = vrot.slane %v1542, %v1546
    %v1549 = vadd.f32 %v1541, %v1547
    %v1550 = vsub.f32 0.0, %v1549
    %v1551 = vmul.f32 %v1550, 1.442695
    %v1552 = vpow.pop %v1551
    %v1553 = vadd.f32 %v1552, 1.0
    %v1554 = vrcp.pop %v1553
    %vm1555 = vcmask 7168
    %1556 = vst.msk [vmem:[%s7] sm:$0xff] %vm1555, %v1554
    // Predicated region
    $region42: #{tpu_custom_call.1} parent=1 // pred_check
      _
    $region43: #{tpu_custom_call.1} parent=1 // pred_check_branch
      %1558 = sbr.rel (0) target = $region45
    $region44: #{tpu_custom_call.1} parent=1 // pred_region
      _
    $region45: #{tpu_custom_call.1} parent=1 // pred_fallthru
      _
    // Predicated region
    $region46: #{tpu_custom_call.1} parent=1 // pred_check
      _
    $region47: #{tpu_custom_call.1} parent=1 // pred_check_branch
      %1560 = sbr.rel (0) target = $region49
    $region48: #{tpu_custom_call.1} parent=1 // pred_region
      _
    $region49: #{tpu_custom_call.1} parent=1 // pred_fallthru
      _
    %1561 = vsyncpa [#allocation4], 1
    %1562 = vsyncpa [#allocation6], 1

</llo_original>
